<compile_context>
chip_gen: v6e
topology: v6e:2x2x1
jax: 0.10.0
libtpu: 0.0.40
codegen_flags: <defaults>
</compile_context>

<pallas_src>
import functools

import jax
import jax.numpy as jnp
from jax.experimental import pallas as pl
from jax.experimental.pallas import tpu as pltpu


def _round_up(x: int, m: int) -> int:
    return ((x + m - 1) // m) * m


def _cheby_kan_kernel(x_ref, coef_ref, bias_ref, o_ref, t_ref, *,
                      degree: int, in_features: int):
    # x_ref:    (TM, in)   f32   input tile (same block for every out tile j)
    # coef_ref: (K, TN)    bf16  fused coefficients for degrees 1..degree
    # bias_ref: (1, TN)    f32   column-sum of the degree-0 coefficients
    # o_ref:    (TM, TN)   bf16  output tile
    # t_ref:    (TM, K)    bf16  VMEM scratch: cached basis T_1..T_degree

    # The basis depends only on the batch tile -> compute it once per batch
    # tile (innermost grid axis j == 0) and reuse it for all other out tiles.
    @pl.when(pl.program_id(1) == 0)
    def _():
        x = jnp.tanh(x_ref[...].astype(jnp.float32))   # tanh + recurrence in f32
        two_x = x + x                                  # hoisted 2*x
        # T_1 = x ; T_d = 2*x*T_{d-1} - T_{d-2}   (T_0 == 1 folded into bias).
        t_prev = jnp.ones_like(x)
        t_curr = x
        t_ref[:, 0:in_features] = t_curr.astype(t_ref.dtype)
        for d in range(2, degree + 1):
            t_next = two_x * t_curr - t_prev
            t_ref[:, (d - 1) * in_features:d * in_features] = t_next.astype(t_ref.dtype)
            t_prev, t_curr = t_curr, t_next

    # Single fused MXU matmul: (TM, K) @ (K, TN), f32 accumulation.
    acc = jnp.dot(t_ref[...], coef_ref[...], preferred_element_type=jnp.float32)
    o_ref[...] = (acc + bias_ref[...]).astype(o_ref.dtype)


def prepare_cheby_params(coefficients, *, block_n: int = 256,
                         operand_dtype=jnp.bfloat16):
    """One-time (parameter-init-time) repack of torch-layout coefficients.

    coefficients: (in_features, out_features, degree+1) f32.
    Returns:
      coef_fused: (degree*in, out_pad) operand_dtype; row index = (d-1)*in + i
      bias:       (1, out_pad) f32;  bias[0, j] = sum_i coeff[i, j, 0]
      meta:       dict with shapes / degree / padding / tile info
    """
    assert block_n % 128 == 0
    in_features, out_features, deg_p1 = coefficients.shape
    degree = deg_p1 - 1
    assert degree > 0

    coef_dio = jnp.transpose(coefficients, (2, 0, 1)).astype(jnp.float32)  # (d+1,in,out)
    bias = jnp.sum(coef_dio[0], axis=0, keepdims=True)                     # (1, out)
    coef_fused = coef_dio[1:].reshape(degree * in_features, out_features)

    # Pad out-features so the output tile is lane-dense AND divides out_pad,
    # so tn never degrades for awkward out_features (done once, here).
    out_pad = _round_up(out_features, 128)
    if out_pad > block_n:
        out_pad = _round_up(out_pad, block_n)
    pad = out_pad - out_features
    if pad:
        coef_fused = jnp.pad(coef_fused, ((0, 0), (0, pad)))
        bias = jnp.pad(bias, ((0, 0), (0, pad)))

    meta = dict(in_features=in_features, out_features=out_features,
                degree=degree, out_pad=out_pad, block_n=block_n)
    return coef_fused.astype(operand_dtype), bias.astype(jnp.float32), meta


def cheby_kan_forward(x, coef_fused, bias, meta, *, tm: int = 1024,
                      out_dtype=jnp.bfloat16,
                      vmem_budget: int = 40 * 1024 * 1024):
    """x: (B, in_features); coef_fused / bias / meta from prepare_cheby_params."""
    B, in_features = x.shape
    assert in_features == meta["in_features"]
    degree = meta["degree"]
    out_features = meta["out_features"]
    out_pad = meta["out_pad"]
    K = degree * in_features
    assert coef_fused.shape == (K, out_pad)

    coef_bytes = jnp.dtype(coef_fused.dtype).itemsize
    out_bytes = jnp.dtype(out_dtype).itemsize
    tn = min(meta["block_n"], out_pad)          # out_pad % tn == 0 by construction

    def vmem_need(tm_):
        return (2 * tm_ * in_features * 4       # x tiles (double-buffered)
                + 2 * K * tn * coef_bytes       # coef tiles
                + 2 * 8 * tn * 4                # bias tiles (sublane-padded)
                + 2 * tm_ * tn * out_bytes      # out tiles
                + tm_ * K * 2)                  # cached basis scratch (bf16)

    # Large batch tile to amortize coefficient re-streaming, shrunk to fit VMEM.
    tm = min(tm, _round_up(B, 8))
    while tm > 8 and vmem_need(tm) > vmem_budget:
        tm = max(8, _round_up(tm // 2, 8))
    # TODO(synk): for very large degree*in_features add a K-axis "arbitrary"
    # grid dimension with an f32 accumulator instead of shrinking tm further.

    grid_j = out_pad // tn
    b_pad = _round_up(B, tm)
    if b_pad // tm == 1 and grid_j == 1 and B > 8:
        # Guarantee >= 2 blocks along the "parallel" axis (v7x has 2 TCs/chip).
        tm = _round_up((B + 1) // 2, 8)
        b_pad = _round_up(B, tm)
    grid_i = b_pad // tm

    if b_pad != B:
        x = jnp.pad(x, ((0, b_pad - B), (0, 0)))

    cost = pl.CostEstimate(
        flops=2 * b_pad * K * out_pad,
        transcendentals=b_pad * in_features,                # tanh once per row
        bytes_accessed=(4 * b_pad * in_features             # x read once
                        + grid_i * (coef_bytes * K * out_pad + 4 * out_pad)
                        + out_bytes * b_pad * out_pad),     # bf16 output write
    )

    kernel = functools.partial(_cheby_kan_kernel, degree=degree,
                               in_features=in_features)

    vmem_limit = int(min(48 * 1024 * 1024,
                         max(vmem_need(tm) + 4 * 1024 * 1024, 16 * 1024 * 1024)))

    out = pl.pallas_call(
        kernel,
        out_shape=jax.ShapeDtypeStruct((b_pad, out_pad), out_dtype),
        grid_spec=pltpu.PrefetchScalarGridSpec(
            num_scalar_prefetch=0,
            grid=(grid_i, grid_j),
            in_specs=[
                pl.BlockSpec((tm, in_features), lambda i, j: (i, 0)),
                pl.BlockSpec((K, tn), lambda i, j: (0, j)),
                pl.BlockSpec((1, tn), lambda i, j: (0, j)),
            ],
            out_specs=pl.BlockSpec((tm, tn), lambda i, j: (i, j)),
            scratch_shapes=[pltpu.VMEM((tm, K), jnp.bfloat16)],
        ),
        compiler_params=pltpu.CompilerParams(
            dimension_semantics=("parallel", "arbitrary"),
            vmem_limit_bytes=vmem_limit,
        ),
        cost_estimate=cost,
    )(x, coef_fused, bias)

    return out[:B, :out_features]


def cheby_kan_reference(x, coefficients):
    """Pure-JAX f32 reference matching the PyTorch forward exactly."""
    degree = coefficients.shape[-1] - 1
    xt = jnp.tanh(x)
    vals = [jnp.ones_like(xt), xt]
    for _ in range(2, degree + 1):
        vals.append(2.0 * xt * vals[-1] - vals[-2])
    cheby = jnp.stack(vals, axis=-1)  # (B, in, degree+1)
    return jnp.einsum("bid,ijd->bj", cheby, coefficients)


if __name__ == "__main__":
    # Module hyperparameters (small, deterministic).
    in_features = 32
    out_features = 24
    degree = 4
    batch = 16

    key = jax.random.PRNGKey(0)
    k_x, k_c = jax.random.split(key)

    # Deterministic parameter init mirroring the module:
    # coefficients ~ randn(in, out, degree+1) * (1 / (in * (degree+1)))
    std = 1.0 / (in_features * (degree + 1))
    coefficients = (
        jax.random.normal(k_c, (in_features, out_features, degree + 1), jnp.float32)
        * std
    )
    x = jax.random.normal(k_x, (batch, in_features), jnp.float32)

    # One-time parameter repack (transpose/reshape/pad/bf16 cast hoisted out of
    # the per-call path), then the tiled Pallas forward.
    coef_fused, bias, meta = prepare_cheby_params(coefficients)
    out = cheby_kan_forward(x, coef_fused, bias, meta)
    out = jax.block_until_ready(out)

    ref = cheby_kan_reference(x, coefficients)
    assert out.shape == (batch, out_features)
    # bf16 MXU operands + bf16 output with f32 accumulation -> bf16-scale tol.
    max_err = float(jnp.max(jnp.abs(out.astype(jnp.float32) - ref)))
    assert max_err < 5e-3, max_err

    print("KERNEL_OK")
</pallas_src>

<mosaic_0001>
module attributes {stable_mosaic.version = 11 : i64} {
  func.func @_cheby_kan_kernel(%arg0: i32, %arg1: i32, %arg2: memref<8x32xf32, #tpu.memory_space<vmem>>, %arg3: memref<128x128xbf16, #tpu.memory_space<vmem>>, %arg4: memref<1x128xf32, #tpu.memory_space<vmem>>, %arg5: memref<8x128xbf16, #tpu.memory_space<vmem>>, %arg6: memref<8x128xbf16, #tpu.memory_space<vmem>>) attributes {dimension_semantics = [#tpu.dimension_semantics<parallel>, #tpu.dimension_semantics<arbitrary>], iteration_bounds = array<i64: 2, 1>, scalar_prefetch = 0 : i64, scratch_operands = 1 : i64, tpu.core_type = #tpu.core_type<tc>, window_params = [{transform_indices = @transform_0, window_bounds = array<i64: 8, 32>}, {transform_indices = @transform_1, window_bounds = array<i64: 128, 128>}, {transform_indices = @transform_2, window_bounds = array<i64: 1, 128>}, {transform_indices = @transform_3, window_bounds = array<i64: 8, 128>}]} {
    %c0_i32 = arith.constant 0 : i32
    %0 = arith.cmpi eq, %arg1, %c0_i32 : i32
    %1 = arith.extui %0 : i1 to i32
    %c0_i32_0 = arith.constant 0 : i32
    %2 = arith.cmpi ne, %1, %c0_i32_0 : i32
    scf.if %2 {
      %c0_8 = arith.constant 0 : index
      %c0_9 = arith.constant 0 : index
      %11 = vector.load %arg2[%c0_8, %c0_9] : memref<8x32xf32, #tpu.memory_space<vmem>>, vector<8x32xf32>
      %12 = math.tanh %11 : vector<8x32xf32>
      %13 = arith.addf %12, %12 : vector<8x32xf32>
      %cst_10 = arith.constant 1.000000e+00 : f32
      %14 = vector.broadcast %cst_10 : f32 to vector<8x32xf32>
      %15 = arith.truncf %12 : vector<8x32xf32> to vector<8x32xbf16>
      %c0_11 = arith.constant 0 : index
      %c0_12 = arith.constant 0 : index
      %16 = vector.load %arg6[%c0_11, %c0_12] : memref<8x128xbf16, #tpu.memory_space<vmem>>, vector<8x32xbf16>
      tpu.vector_store %arg6[%c0_11, %c0_12], %15 {strides = array<i32>} : memref<8x128xbf16, #tpu.memory_space<vmem>>, vector<8x32xbf16>,
      %17 = arith.mulf %13, %12 : vector<8x32xf32>
      %18 = arith.subf %17, %14 : vector<8x32xf32>
      %19 = arith.truncf %18 : vector<8x32xf32> to vector<8x32xbf16>
      %c0_13 = arith.constant 0 : index
      %c32 = arith.constant 32 : index
      %20 = vector.load %arg6[%c0_13, %c32] : memref<8x128xbf16, #tpu.memory_space<vmem>>, vector<8x32xbf16>
      tpu.vector_store %arg6[%c0_13, %c32], %19 {strides = array<i32>} : memref<8x128xbf16, #tpu.memory_space<vmem>>, vector<8x32xbf16>,
      %21 = arith.mulf %13, %18 : vector<8x32xf32>
      %22 = arith.subf %21, %12 : vector<8x32xf32>
      %23 = arith.truncf %22 : vector<8x32xf32> to vector<8x32xbf16>
      %c0_14 = arith.constant 0 : index
      %c64 = arith.constant 64 : index
      %24 = vector.load %arg6[%c0_14, %c64] : memref<8x128xbf16, #tpu.memory_space<vmem>>, vector<8x32xbf16>
      tpu.vector_store %arg6[%c0_14, %c64], %23 {strides = array<i32>} : memref<8x128xbf16, #tpu.memory_space<vmem>>, vector<8x32xbf16>,
      %25 = arith.mulf %13, %22 : vector<8x32xf32>
      %26 = arith.subf %25, %18 : vector<8x32xf32>
      %27 = arith.truncf %26 : vector<8x32xf32> to vector<8x32xbf16>
      %c0_15 = arith.constant 0 : index
      %c96 = arith.constant 96 : index
      %28 = vector.load %arg6[%c0_15, %c96] : memref<8x128xbf16, #tpu.memory_space<vmem>>, vector<8x32xbf16>
      tpu.vector_store %arg6[%c0_15, %c96], %27 {strides = array<i32>} : memref<8x128xbf16, #tpu.memory_space<vmem>>, vector<8x32xbf16>,
    } else {
    }
    %c0 = arith.constant 0 : index
    %c0_1 = arith.constant 0 : index
    %3 = vector.load %arg6[%c0, %c0_1] : memref<8x128xbf16, #tpu.memory_space<vmem>>, vector<8x128xbf16>
    %c0_2 = arith.constant 0 : index
    %c0_3 = arith.constant 0 : index
    %4 = vector.load %arg3[%c0_2, %c0_3] : memref<128x128xbf16, #tpu.memory_space<vmem>>, vector<128x128xbf16>
    %cst = arith.constant dense<0.000000e+00> : vector<8x128xf32>
    %5 = tpu.matmul %3, %4, %cst {dimension_numbers = #tpu.dot_dimension_numbers<[1], [0], [0], [1], [0, 0, 1, 1], [], []>} : vector<8x128xbf16>, vector<128x128xbf16>, vector<8x128xf32> -> vector<8x128xf32>
    %c0_4 = arith.constant 0 : index
    %c0_5 = arith.constant 0 : index
    %6 = vector.load %arg4[%c0_4, %c0_5] : memref<1x128xf32, #tpu.memory_space<vmem>>, vector<1x128xf32>
    %7 = vector.broadcast %6 : vector<1x128xf32> to vector<8x128xf32>
    %8 = arith.addf %5, %7 : vector<8x128xf32>
    %9 = arith.truncf %8 : vector<8x128xf32> to vector<8x128xbf16>
    %c0_6 = arith.constant 0 : index
    %c0_7 = arith.constant 0 : index
    %10 = vector.load %arg5[%c0_6, %c0_7] : memref<8x128xbf16, #tpu.memory_space<vmem>>, vector<8x128xbf16>
    tpu.vector_store %arg5[%c0_6, %c0_7], %9 {strides = array<i32>} : memref<8x128xbf16, #tpu.memory_space<vmem>>, vector<8x128xbf16>,
    return
  }
  func.func @transform_0(%arg0: i32, %arg1: i32) -> (i32, i32) {
    %c0_i32 = arith.constant 0 : i32
    %c0_i32_0 = arith.constant 0 : i32
    return %arg0, %c0_i32 : i32, i32
  }
  func.func @transform_1(%arg0: i32, %arg1: i32) -> (i32, i32) {
    %c0_i32 = arith.constant 0 : i32
    %c0_i32_0 = arith.constant 0 : i32
    return %c0_i32, %arg1 : i32, i32
  }
  func.func @transform_2(%arg0: i32, %arg1: i32) -> (i32, i32) {
    %c0_i32 = arith.constant 0 : i32
    %c0_i32_0 = arith.constant 0 : i32
    return %c0_i32, %arg1 : i32, i32
  }
  func.func @transform_3(%arg0: i32, %arg1: i32) -> (i32, i32) {
    %c0_i32 = arith.constant 0 : i32
    return %arg0, %arg1 : i32, i32
  }
}

</mosaic_0001>

<llo_original>
// kernel: tpu_custom_call.1
$region0: #{tpu_custom_call.1}
  #allocation0 [shape = 'u32[]', space=smem, size = 0x4, offset = 0x4, fixed_abs, tag = 'smem constant byte address 0x4 - core index']
  #allocation1 [shape = 'u32[144,128]{1,0:T(1,128)}', space=vmem, size = 0x12000, scoped, tag = 'internal scratch']
  #allocation2 [shape = 'bf16[8,128]{1,0:T(8,128)(2,1)}', space=vmem, size = 0x800, scoped, tag = 'scratch operand']
  %s0 = inlined_call_operand.hbm [shape: f32[16,32], index: 0, kind: input, shape index: {}]
  %s1 = inlined_call_operand.hbm [shape: bf16[128,128], index: 1, kind: input, shape index: {}]
  %s2 = inlined_call_operand.vmem [shape: f32[1,128], index: 2, kind: input, shape index: {}]
  %s3 = inlined_call_operand.hbm [shape: bf16[16,128], index: 3, kind: output, shape index: {}]
  %s4 = sld [smem:[#allocation0]]
  $region57: #{tpu_custom_call.1} parent=0
    _
  %s6 = ssub.s32 1, %s4
  %s7 = scalar_select 0, %s6, %s4
  $region1: #{tpu_custom_call.1} parent=0
    #allocation3 [shape = 'u8[8192]{0}', space=vmem, size = 0x2000, scoped, tag = 'input window, operand 0']
    #allocation4 [shape = 's32[2]{0}', space=sflag, size = 0x8, scoped, tag = 'scoped memory for tpu_custom_call.1']
    #allocation5 [shape = 's32[2]{0}', space=sflag, size = 0x8, scoped, tag = 'scoped memory for tpu_custom_call.1']
    #allocation6 [shape = 'u8[32768]{0}', space=vmem, size = 0x8000, scoped, tag = 'input window, operand 1, single buffered']
    #allocation7 [shape = 's32[1]{0}', space=sflag, size = 0x4, scoped, tag = 'scoped memory for tpu_custom_call.1']
    #allocation8 [shape = 'u8[4096]{0}', space=vmem, size = 0x1000, scoped, tag = 'output window, operand 0']
    %8 = vsyncpa [#allocation4], 0
    %s9 = scalar_lea.sflag [#allocation4], 1
    %10 = vsyncpa %s9, 0
    %11 = vsyncpa [#allocation7], 0
    %12 = vsyncpa [#allocation5], 0
    %s13 = scalar_lea.sflag [#allocation5], 1
    %14 = vsyncpa %s13, 0
    loop: start=0, step=1, limit=4
    $region2: #{tpu_custom_call.1} parent=1 // loop_pre_header
      _
    $region3: #{tpu_custom_call.1} parent=1 // loop_header
      %s16 = sphi 0, %s20
      %p17 = scmp.ge.s32.totalorder %s16, 4
      %s23 = sphi 0, %s35
      %s24 = sphi 0, %s31
      %s25 = sphi 0, %s23
      %s26 = sphi 0, %s24
      %s27 = sphi 0, %s25
      %s28 = sphi 0, %s26
      %s38 = sphi 0, %s40
      %s41 = sphi 0, %s38
      %s42 = sphi 0, %s41
      %s58 = sphi 0, %s42
      %s64 = sphi 0, %s66
      %s67 = sphi 0, %s64
      %s68 = sphi 0, %s67
      %s84 = sphi 0, %s68
      %s90 = sphi 0, %s92
      %s93 = sphi 0, %s90
      %s94 = sphi 0, %s93
      %s110 = sphi 0, %s94
      %s118 = sphi 0, %s120
      %s121 = sphi 0, %s118
      %s122 = sphi 0, %s121
      %s138 = sphi 0, %s122
    $region4: #{tpu_custom_call.1} parent=1 // loop_header_branch
      %19 = sbr.rel (%p17) target = $region8
    $region5: #{tpu_custom_call.1} parent=1 // loop_body
      %s21 = ssub.s32 %s16, 1
      %s22 = ssub.s32 %s16, 2
      %s29 = sadd.s32 1, %s24
      %p30 = scmp.ge.s32.totalorder %s29, 1
      %s31 = scalar_select %p30, 0, %s29
      %s32 = sadd.s32 1, %s23
      %s33 = scalar_select %p30, %s32, %s23
      %p34 = scmp.ge.s32.totalorder %s33, 2
      %s35 = scalar_select %p34, 0, %s33
      %s36 = ssub.s32 %s23, %s35
      %p37 = scmp.eq.s32.totalorder %s36, 0
      %s39 = sadd.s32 %s38, 1
      %s40 = scalar_select %p37, %s38, %s39
      %p43 = pneg %p37
      %p44 = scmp.eq.s32.totalorder %s16, 1
      %p45 = por %p43, %p44
      %p46 = scmp.ne.s32.totalorder %s38, %s41
      %p47 = scmp.eq.s32.totalorder %s16, 0
      %p48 = por %p46, %p47
      %p49 = scmp.ne.s32.totalorder %s38, %s41
      %p50 = scmp.eq.s32.totalorder %s21, 1
      %p51 = por %p49, %p50
      %p52 = scmp.ne.s32.totalorder %s41, %s42
      %p53 = scmp.eq.s32.totalorder %s21, 0
      %p54 = por %p52, %p53
      %p55 = scmp.ne.s32.totalorder %s41, %s42
      %p56 = scmp.eq.s32.totalorder %s22, 1
      %p57 = por %p55, %p56
      %p59 = scmp.ne.s32.totalorder %s42, %s58
      %p60 = scmp.eq.s32.totalorder %s22, 0
      %p61 = por %p59, %p60
      %s62 = ssub.s32 %s24, %s31
      %p63 = scmp.eq.s32.totalorder %s62, 0
      %s65 = sadd.s32 %s64, 1
      %s66 = scalar_select %p63, %s64, %s65
      %p69 = pneg %p63
      %p70 = scmp.eq.s32.totalorder %s16, 1
      %p71 = por %p69, %p70
      %p72 = scmp.ne.s32.totalorder %s64, %s67
      %p73 = scmp.eq.s32.totalorder %s16, 0
      %p74 = por %p72, %p73
      %p75 = scmp.ne.s32.totalorder %s64, %s67
      %p76 = scmp.eq.s32.totalorder %s21, 1
      %p77 = por %p75, %p76
      %p78 = scmp.ne.s32.totalorder %s67, %s68
      %p79 = scmp.eq.s32.totalorder %s21, 0
      %p80 = por %p78, %p79
      %p81 = scmp.ne.s32.totalorder %s67, %s68
      %p82 = scmp.eq.s32.totalorder %s22, 1
      %p83 = por %p81, %p82
      %p85 = scmp.ne.s32.totalorder %s68, %s84
      %p86 = scmp.eq.s32.totalorder %s22, 0
      %p87 = por %p85, %p86
      %s88 = ssub.s32 %s24, %s31
      %p89 = scmp.eq.s32.totalorder %s88, 0
      %s91 = sadd.s32 %s90, 1
      %s92 = scalar_select %p89, %s90, %s91
      %p95 = pneg %p89
      %p96 = scmp.eq.s32.totalorder %s16, 1
      %p97 = por %p95, %p96
      %p98 = scmp.ne.s32.totalorder %s90, %s93
      %p99 = scmp.eq.s32.totalorder %s16, 0
      %p100 = por %p98, %p99
      %p101 = scmp.ne.s32.totalorder %s90, %s93
      %p102 = scmp.eq.s32.totalorder %s21, 1
      %p103 = por %p101, %p102
      %p104 = scmp.ne.s32.totalorder %s93, %s94
      %p105 = scmp.eq.s32.totalorder %s21, 0
      %p106 = por %p104, %p105
      %p107 = scmp.ne.s32.totalorder %s93, %s94
      %p108 = scmp.eq.s32.totalorder %s22, 1
      %p109 = por %p107, %p108
      %p111 = scmp.ne.s32.totalorder %s94, %s110
      %p112 = scmp.eq.s32.totalorder %s22, 0
      %p113 = por %p111, %p112
      %s114 = ssub.s32 %s23, %s35
      %s115 = ssub.s32 %s24, %s31
      %s116 = sor.u32 %s114, %s115
      %p117 = scmp.eq.s32.totalorder %s116, 0
      %s119 = sadd.s32 %s118, 1
      %s120 = scalar_select %p117, %s118, %s119
      %p123 = pneg %p117
      %p124 = scmp.eq.s32.totalorder %s16, 1
      %p125 = por %p123, %p124
      %p126 = scmp.ne.s32.totalorder %s118, %s121
      %p127 = scmp.eq.s32.totalorder %s16, 0
      %p128 = por %p126, %p127
      %p129 = scmp.ne.s32.totalorder %s118, %s121
      %p130 = scmp.eq.s32.totalorder %s21, 1
      %p131 = por %p129, %p130
      %p132 = scmp.ne.s32.totalorder %s121, %s122
      %p133 = scmp.eq.s32.totalorder %s21, 0
      %p134 = por %p132, %p133
      %p135 = scmp.ne.s32.totalorder %s121, %s122
      %p136 = scmp.eq.s32.totalorder %s22, 1
      %p137 = por %p135, %p136
      %p139 = scmp.ne.s32.totalorder %s122, %s138
      %p140 = scmp.eq.s32.totalorder %s22, 0
      %p141 = por %p139, %p140
      %p142 = scmp.le.s32.totalorder 1, %s16
      %p143 = scmp.lt.s32.totalorder %s16, 3
      %p144 = pnand %p142, %p143
      %p145 = pneg %p144
      // Predicated region
      $region9: #{tpu_custom_call.1} parent=5 // pred_check
        _
      $region10: #{tpu_custom_call.1} parent=5 // pred_check_branch
        %147 = sbr.rel (%p144) target = $region12
      $region11: #{tpu_custom_call.1} parent=5 // pred_region
        %s148 = ssub.s32 %s16, 1
        // Predicated region
        $region13: #{tpu_custom_call.1} parent=11 // pred_check
          %p149 = pneg %p80
        $region14: #{tpu_custom_call.1} parent=11 // pred_check_branch
          %151 = sbr.rel (%p149) target = $region16
        $region15: #{tpu_custom_call.1} parent=11 // pred_region
          %s153 = ssub.s32 1024, 1024
          %154 = vsyncadd [#allocation7], %s153
          %s155 = smul.addr %s26, 64
          %s156 = scalar_lea.hbm %s1, %s155
          %s157 = sshll.u32 [#allocation6], 4
          %s158 = int_to_ptr.vmem [resolvable:$true] %s157
          %163 = dma.hbm_to_vmem [thread:$0]  %s156, 1024, %s158, [#allocation7], 64, 64, 4
        $region16: #{tpu_custom_call.1} parent=11 // pred_fallthru
          _
        // Predicated region
        $region17: #{tpu_custom_call.1} parent=11 // pred_check
          %p164 = pneg %p106
        $region18: #{tpu_custom_call.1} parent=11 // pred_check_branch
          %166 = sbr.rel (%p164) target = $region20
        $region19: #{tpu_custom_call.1} parent=11 // pred_region
          %p167 = scmp.lt.s32.totalorder %s26, 0
          %s168 = scalar_select %p167, %s26, 0
          %s169 = scalar_lea.vmem %s2, %s168
        $region20: #{tpu_custom_call.1} parent=11 // pred_fallthru
          _
      $region12: #{tpu_custom_call.1} parent=5 // pred_fallthru
        _
      %p170 = scmp.lt.s32.totalorder %s16, 2
      // Predicated region
      $region21: #{tpu_custom_call.1} parent=5 // pred_check
        %p171 = pneg %p170
      $region22: #{tpu_custom_call.1} parent=5 // pred_check_branch
        %173 = sbr.rel (%p171) target = $region24
      $region23: #{tpu_custom_call.1} parent=5 // pred_region
        // Predicated region
        $region25: #{tpu_custom_call.1} parent=23 // pred_check
          %p174 = pneg %p48
        $region26: #{tpu_custom_call.1} parent=23 // pred_check_branch
          %176 = sbr.rel (%p174) target = $region28
        $region27: #{tpu_custom_call.1} parent=23 // pred_region
          %s177 = sand.u32 %s38, 1
          %s178 = scalar_lea.sflag [#allocation4], %s177
          %s179 = sand.u32 %s38, 1
          %s180 = smul.addr %s179, 8
          %s181 = scalar_lea.vmem [#allocation3], %s180
          %s183 = ssub.s32 128, 128
          %184 = vsyncadd %s178, %s183
          %s185 = smul.addr %s23, 128
          %s186 = scalar_lea.hbm %s0, %s185
          %s188 = sshll.u32 %s181, 4
          %s189 = int_to_ptr.vmem [resolvable:$true] %s188
          %191 = dma.hbm_to_vmem [thread:$0]  %s186, 128, %s189, %s178
        $region28: #{tpu_custom_call.1} parent=23 // pred_fallthru
          _
      $region24: #{tpu_custom_call.1} parent=5 // pred_fallthru
        _
      %p192 = scmp.le.s32.totalorder 1, %s16
      %p193 = scmp.lt.s32.totalorder %s16, 3
      %p194 = pnand %p192, %p193
      %p195 = pneg %p194
      // Predicated region
      $region29: #{tpu_custom_call.1} parent=5 // pred_check
        _
      $region30: #{tpu_custom_call.1} parent=5 // pred_check_branch
        %197 = sbr.rel (%p194) target = $region32
      $region31: #{tpu_custom_call.1} parent=5 // pred_region
        %s198 = ssub.s32 %s16, 1
        %s199 = sand.u32 %s41, 1
        %s200 = scalar_lea.sflag [#allocation4], %s199
        %s201 = sand.u32 %s41, 1
        %s202 = smul.addr %s201, 8
        %s203 = scalar_lea.vmem [#allocation3], %s202
        // Predicated region
        $region33: #{tpu_custom_call.1} parent=31 // pred_check
          %p204 = pneg %p54
        $region34: #{tpu_custom_call.1} parent=31 // pred_check_branch
          %206 = sbr.rel (%p204) target = $region36
        $region35: #{tpu_custom_call.1} parent=31 // pred_region
          %207 = dma.done %s200, 128
        $region36: #{tpu_custom_call.1} parent=31 // pred_fallthru
          _
        // Predicated region
        $region37: #{tpu_custom_call.1} parent=31 // pred_check
          %p208 = pneg %p80
        $region38: #{tpu_custom_call.1} parent=31 // pred_check_branch
          %210 = sbr.rel (%p208) target = $region40
        $region39: #{tpu_custom_call.1} parent=31 // pred_region
          %211 = dma.done [#allocation7], 1024
        $region40: #{tpu_custom_call.1} parent=31 // pred_fallthru
          _
        %s212 = sand.u32 %s41, 1
        %s213 = scalar_lea.sflag [#allocation4], %s212
        %s214 = sand.u32 %s41, 1
        %s215 = smul.addr %s214, 8
        %s216 = scalar_lea.vmem [#allocation3], %s215
        %p217 = pneg %p54
        %p218 = pneg %p51
        %p219 = pneg %p80
        %p220 = pneg %p77
        %p221 = scmp.lt.s32.totalorder %s26, 0
        %s222 = scalar_select %p221, %s26, 0
        %s223 = scalar_lea.vmem %s2, %s222
        %p224 = pneg %p106
        %p225 = pneg %p103
        %p226 = pneg %p134
        %p227 = pneg %p131
        %s228 = sand.u32 %s121, 1
        %s229 = scalar_lea.sflag [#allocation5], %s228
        %s230 = sand.u32 %s121, 1
        %s231 = smul.addr %s230, 4
        %s232 = scalar_lea.vmem [#allocation8], %s231
        %p233 = scmp.lt.s32.totalorder %s26, 0
        %s234 = scalar_select %p233, %s26, 0
        %s235 = scalar_lea.vmem %s2, %s234
        %p237 = scmp.eq.s32.totalorder %s26, 0
        // Predicated region
        $region41: #{tpu_custom_call.1} parent=31 // pred_check
          %p238 = pneg %p237
        $region42: #{tpu_custom_call.1} parent=31 // pred_check_branch
          %240 = sbr.rel (%p238) target = $region44
        $region43: #{tpu_custom_call.1} parent=31 // pred_region
          %v241 = vld [vmem:[%s203] sm:$0xff]
          %v242 = vtanh.pop %v241
          %v243 = vadd.f32 %v242, %v242
          %v244 = vpack.c.bf16 %v242, %v242
          %vm245 = vcmask 257024
          %246 = vst.msk [vmem:[#allocation2] sm:$0xf] %vm245, %v244
          %v247 = vmul.f32 %v243, %v242
          %v248 = vsub.f32 %v247, 1.0
          %v249 = vpack.c.bf16 %v248, %v248
          %v251 = vunpack.c.l.b16 %v249
          %v252 = vpack.c.b16 %v251, %v251
          %253 = vrot.lane.b32.xlu0 %v252, 32
          %v254 = vpop.permute.xlu0 %253
          %vm256 = vcmask 519424
          %257 = vst.msk [vmem:[#allocation2] sm:$0xf] %vm256, %v254
          %v258 = vmul.f32 %v243, %v248
          %v259 = vsub.f32 %v258, %v242
          %v260 = vpack.c.bf16 %v259, %v259
          %v262 = vunpack.c.l.b16 %v260
          %v263 = vpack.c.b16 %v262, %v262
          %264 = vrot.lane.b32.xlu0 %v263, 64
          %v265 = vpop.permute.xlu0 %264
          %vm267 = vcmask 781824
          %268 = vst.msk [vmem:[#allocation2] sm:$0xf] %vm267, %v265
          %v269 = vmul.f32 %v243, %v259
          %v270 = vsub.f32 %v269, %v248
          %v271 = vpack.c.bf16 %v270, %v270
          %v273 = vunpack.c.l.b16 %v271
          %v274 = vpack.c.b16 %v273, %v273
          %275 = vrot.lane.b32.xlu0 %v274, 96
          %v276 = vpop.permute.xlu0 %275
          %vm278 = vcmask 1044224
          %279 = vst.msk [vmem:[#allocation2] sm:$0xf] %vm278, %v276
        $region44: #{tpu_custom_call.1} parent=31 // pred_fallthru
          _
        %v280 = vld [vmem:[#allocation2] sm:$0xf]
        %v281 = vld [vmem:[#allocation6] sm:$0xf]
        %v282 = vld [vmem:[#allocation6 + $0x4] sm:$0xf]
        %v283 = vld [vmem:[#allocation6 + $0x8] sm:$0xf]
        %v284 = vld [vmem:[#allocation6 + $0xc] sm:$0xf]
        %v285 = vld [vmem:[#allocation6 + $0x10] sm:$0xf]
        %v286 = vld [vmem:[#allocation6 + $0x14] sm:$0xf]
        %v287 = vld [vmem:[#allocation6 + $0x18] sm:$0xf]
        %v288 = vld [vmem:[#allocation6 + $0x1c] sm:$0xf]
        %v289 = vld [vmem:[#allocation6 + $0x20] sm:$0xf]
        %v290 = vld [vmem:[#allocation6 + $0x24] sm:$0xf]
        %v291 = vld [vmem:[#allocation6 + $0x28] sm:$0xf]
        %v292 = vld [vmem:[#allocation6 + $0x2c] sm:$0xf]
        %v293 = vld [vmem:[#allocation6 + $0x30] sm:$0xf]
        %v294 = vld [vmem:[#allocation6 + $0x34] sm:$0xf]
        %v295 = vld [vmem:[#allocation6 + $0x38] sm:$0xf]
        %v296 = vld [vmem:[#allocation6 + $0x3c] sm:$0xf]
        %v297 = vld [vmem:[%s235] sm:$0x1]
        %v299 = vlaneseq
        %v300 = vshrl.u32 %v299, 7
        %v301 = vsub.s32 0, %v300
        %v302 = vrot.slane %v297, %v301
        %v320 = vunpack.c.l.b16 %v281
        %v321 = vunpack.c.l.b16 %v282
        %v322 = vunpack.c.l.b16 %v283
        %v323 = vunpack.c.l.b16 %v284
        %v324 = vunpack.c.l.b16 %v285
        %v325 = vunpack.c.l.b16 %v286
        %v326 = vunpack.c.l.b16 %v287
        %v327 = vunpack.c.l.b16 %v288
        %v328 = vunpack.c.l.b16 %v289
        %v329 = vunpack.c.l.b16 %v290
        %v330 = vunpack.c.l.b16 %v291
        %v331 = vunpack.c.l.b16 %v292
        %v332 = vunpack.c.l.b16 %v293
        %v333 = vunpack.c.l.b16 %v294
        %v334 = vunpack.c.l.b16 %v295
        %v335 = vunpack.c.l.b16 %v296
        %v336 = vpack.c.b16 %v321, %v320
        %v337 = vpack.c.b16 %v323, %v322
        %v338 = vpack.c.b16 %v325, %v324
        %v339 = vpack.c.b16 %v327, %v326
        %v340 = vpack.c.b16 %v329, %v328
        %v341 = vpack.c.b16 %v331, %v330
        %v342 = vpack.c.b16 %v333, %v332
        %v343 = vpack.c.b16 %v335, %v334
        %352 = vmatprep.subr.bf16.mxu0 0
        %353 = vmatpush1.bf16.msra.mxu0 %v343
        %354 = vmatprep.subr.bf16.mxu0 0
        %355 = vmatpush1.bf16.msra.mxu0 %v342
        %356 = vmatprep.subr.bf16.mxu0 0
        %357 = vmatpush1.bf16.msra.mxu0 %v341
        %358 = vmatprep.subr.bf16.mxu0 0
        %359 = vmatpush1.bf16.msra.mxu0 %v340
        %360 = vmatprep.subr.bf16.mxu0 0
        %361 = vmatpush1.bf16.msra.mxu0 %v339
        %362 = vmatprep.subr.bf16.mxu0 0
        %363 = vmatpush1.bf16.msra.mxu0 %v338
        %364 = vmatprep.subr.bf16.mxu0 0
        %365 = vmatpush1.bf16.msra.mxu0 %v337
        %366 = vmatprep.subr.bf16.mxu0 0
        %367 = vmatpush1.bf16.msra.mxu0 %v336
        %368 = vmatprep.subr.bf16.mxu0 0
        %369 = vmatpush2.bf16.msra.mxu0 0
        %370 = vmatprep.subr.bf16.mxu0 0
        %371 = vmatpush2.bf16.msra.mxu0 0
        %372 = vmatprep.subr.bf16.mxu0 0
        %373 = vmatpush2.bf16.msra.mxu0 0
        %374 = vmatprep.subr.bf16.mxu0 0
        %375 = vmatpush2.bf16.msra.mxu0 0
        %376 = vmatprep.subr.bf16.mxu0 0
        %377 = vmatpush2.bf16.msra.mxu0 0
        %378 = vmatprep.subr.bf16.mxu0 0
        %379 = vmatpush2.bf16.msra.mxu0 0
        %380 = vmatprep.subr.bf16.mxu0 0
        %381 = vmatpush2.bf16.msra.mxu0 0
        %382 = vmatprep.subr.bf16.mxu0 0
        %383 = vmatpush2.bf16.msra.mxu0 0
        %384 = vmatprep.mubr.bf16.mxu0 0
        %385 = vmatmul.mubr.bf16.gmra.mxu0 %v280
        %v386 = vpop.f32.mrf.mxu0
        %v387 = vadd.f32 %v302, %v386
        %v388 = vpop.f32.mrf.mxu0
        %v389 = vpop.f32.mrf.mxu0
        %v390 = vpop.f32.mrf.mxu0
        %391 = vdwg.mxu0
        %v392 = vpack.c.bf16 %v387, %v387
        %393 = vst [vmem:[%s232] sm:$0xf] %v392
        %s394 = sand.u32 %s121, 1
        %s395 = scalar_lea.sflag [#allocation5], %s394
        %s396 = sand.u32 %s121, 1
        %s397 = smul.addr %s396, 4
        %s398 = scalar_lea.vmem [#allocation8], %s397
        // Predicated region
        $region45: #{tpu_custom_call.1} parent=31 // pred_check
          %p399 = pneg %p131
        $region46: #{tpu_custom_call.1} parent=31 // pred_check_branch
          %401 = sbr.rel (%p399) target = $region48
        $region47: #{tpu_custom_call.1} parent=31 // pred_region
          %s403 = ssub.s32 64, 64
          %404 = vsyncadd %s395, %s403
          %s405 = sadd.s32 %s26, %s25
          %s406 = smul.addr %s405, 64
          %s407 = scalar_lea.hbm %s3, %s406
          %s409 = sshll.u32 %s398, 4
          %s410 = int_to_ptr.vmem [resolvable:$true] %s409
          %412 = dma.vmem_to_hbm [thread:$0]  %s410, 64, %s407, %s395
        $region48: #{tpu_custom_call.1} parent=31 // pred_fallthru
          _
      $region32: #{tpu_custom_call.1} parent=5 // pred_fallthru
        _
      %p413 = scmp.le.s32.totalorder 2, %s16
      // Predicated region
      $region49: #{tpu_custom_call.1} parent=5 // pred_check
        %p414 = pneg %p413
      $region50: #{tpu_custom_call.1} parent=5 // pred_check_branch
        %416 = sbr.rel (%p414) target = $region52
      $region51: #{tpu_custom_call.1} parent=5 // pred_region
        %s417 = ssub.s32 %s16, 2
        // Predicated region
        $region53: #{tpu_custom_call.1} parent=51 // pred_check
          %p418 = pneg %p137
        $region54: #{tpu_custom_call.1} parent=51 // pred_check_branch
          %420 = sbr.rel (%p418) target = $region56
        $region55: #{tpu_custom_call.1} parent=51 // pred_region
          %s421 = sand.u32 %s122, 1
          %s422 = scalar_lea.sflag [#allocation5], %s421
          %s423 = sand.u32 %s122, 1
          %s424 = smul.addr %s423, 4
          %s425 = scalar_lea.vmem [#allocation8], %s424
          %426 = dma.done %s422, 64
        $region56: #{tpu_custom_call.1} parent=51 // pred_fallthru
          _
      $region52: #{tpu_custom_call.1} parent=5 // pred_fallthru
        _
    $region6: #{tpu_custom_call.1} parent=1 // loop_footer
      %s20 = sadd.s32 1, %s16
    $region7: #{tpu_custom_call.1} parent=1 // loop_footer_branch
      %15 = sbr.rel target = $region3
    $region8: #{tpu_custom_call.1} parent=1 // loop_exit
      _
    %427 = vsyncpa [#allocation4], 1
    %s428 = scalar_lea.sflag [#allocation4], 1
    %429 = vsyncpa %s428, 1
    %430 = vsyncpa [#allocation7], 1
    %431 = vsyncpa [#allocation5], 1
    %s432 = scalar_lea.sflag [#allocation5], 1
    %433 = vsyncpa %s432, 1

</llo_original>
